<compile_context>
chip_gen: v6e
topology: v6e:2x2x1
jax: 0.10.0
libtpu: 0.0.40
codegen_flags: <defaults>
</compile_context>

<pallas_src>
import functools

import jax
import jax.numpy as jnp
from jax.experimental import pallas as pl
from jax.experimental.pallas import tpu as pltpu


def _round_up(n, m):
    return ((n + m - 1) // m) * m


def _fit(a, rows, cols):
    """Slice / zero-pad a 2-D array to exactly (rows, cols)."""
    r, c = a.shape
    a = a[:min(r, rows), :min(c, cols)]
    return jnp.pad(a, ((0, rows - a.shape[0]), (0, cols - a.shape[1])))


# ---------------------------------------------------------------------------
# Pallas kernel: one fused SAGEConv layer.
# Reduction over source nodes (grid axis 1) accumulates into an f32 VMEM scratch;
# bias + lin_r + activation run only in the pl.when(k == last) epilogue.
# ---------------------------------------------------------------------------
def _sage_layer_kernel(a_ref, x_ref, xt_ref, inv_deg_ref, wl_ref, bl_ref, wr_ref,
                       o_ref, acc_ref, *, apply_relu, apply_log_softmax, dout_valid):
    k = pl.program_id(1)

    @pl.when(k == 0)
    def _():
        acc_ref[...] = jnp.zeros_like(acc_ref)

    # Neighbor-sum tile: (TM, TK) bf16 adjacency  @  (TK, DIN) bf16 features -> f32.
    acc_ref[...] += jnp.dot(a_ref[...], x_ref[...],
                            preferred_element_type=jnp.float32)

    @pl.when(k == pl.num_programs(1) - 1)
    def _():
        # Exact PyG mean: normalize the neighbor sum in f32.
        agg = acc_ref[...] * inv_deg_ref[...]
        # SAGEConv: lin_l(mean(x_src)) + lin_r(x_target); only lin_l carries a bias.
        # TODO(synk): for layers with dout < din it is cheaper to reorder to
        # A @ (X @ W_l); with channels padded to 128 both orders cost the same here.
        out = jnp.dot(agg, wl_ref[...], preferred_element_type=jnp.float32)
        out = out + bl_ref[...]
        out = out + jnp.dot(xt_ref[...].astype(jnp.float32), wr_ref[...],
                            preferred_element_type=jnp.float32)
        if apply_relu:
            out = jnp.maximum(out, 0.0)
            # F.dropout(p=0.5) in eval mode is identity.
            # TODO(synk): training-mode dropout would use pltpu.prng_seed /
            # pltpu.prng_random_bits; omitted for deterministic eval semantics.
        if apply_log_softmax:
            # Channels are zero-padded to 128 lanes: mask padded lanes to -inf
            # so they do not contribute to the max / sum.
            lane = jax.lax.broadcasted_iota(jnp.int32, out.shape, 1)
            valid = lane < dout_valid
            out = jnp.where(valid, out, -jnp.inf)
            m = jnp.max(out, axis=-1, keepdims=True)
            shifted = out - m
            lse = jnp.log(jnp.sum(jnp.where(valid, jnp.exp(shifted), 0.0),
                                  axis=-1, keepdims=True))
            out = shifted - lse
        o_ref[...] = out.astype(o_ref.dtype)


def sage_layer(a01, inv_deg, x, w_l, b_l, w_r, *, dout_valid, apply_relu,
               apply_log_softmax, tm, tk):
    nt_pad, ns_pad = a01.shape
    din_pad = x.shape[1]
    dout_pad = w_l.shape[1]
    grid = (nt_pad // tm, ns_pad // tk)

    kernel = functools.partial(
        _sage_layer_kernel,
        apply_relu=apply_relu,
        apply_log_softmax=apply_log_softmax,
        dout_valid=dout_valid,
    )

    return pl.pallas_call(
        kernel,
        out_shape=jax.ShapeDtypeStruct((nt_pad, dout_pad), jnp.float32),
        grid_spec=pltpu.PrefetchScalarGridSpec(
            num_scalar_prefetch=0,
            grid=grid,
            in_specs=[
                # bf16 0/1 adjacency tile, streamed & double-buffered.
                pl.BlockSpec((tm, tk), lambda i, k: (i, k)),
                # bf16 source-feature tile along the reduction axis.
                pl.BlockSpec((tk, din_pad), lambda i, k: (k, 0)),
                # target features = leading rows of the SAME HBM array x
                # (no separate x_target copy; second BlockSpec into x).
                pl.BlockSpec((tm, din_pad), lambda i, k: (i, 0)),
                # per-target 1/deg in f32 (exact PyG-mean normalization).
                pl.BlockSpec((tm, 1), lambda i, k: (i, 0)),
                # weights / bias: fully VMEM-resident across the grid.
                pl.BlockSpec((din_pad, dout_pad), lambda i, k: (0, 0)),
                pl.BlockSpec((1, dout_pad), lambda i, k: (0, 0)),
                pl.BlockSpec((din_pad, dout_pad), lambda i, k: (0, 0)),
            ],
            out_specs=pl.BlockSpec((tm, dout_pad), lambda i, k: (i, 0)),
            scratch_shapes=[pltpu.VMEM((tm, din_pad), jnp.float32)],
        ),
        compiler_params=pltpu.CompilerParams(
            # target-row tiles are independent (megacore-shardable on v7x);
            # the neighbor axis is a reduction.
            dimension_semantics=("parallel", "arbitrary"),
            vmem_limit_bytes=48 * 1024 * 1024,
        ),
    )(a01, x, x, inv_deg, w_l, b_l, w_r)


# ---------------------------------------------------------------------------
# Plain-JAX glue: dense 0/1 adjacency (bf16) + 1/deg (f32) from edge_index.
# TODO(synk): at production fanouts replace the dense O(nt*ns) adjacency with a
# gather-based aggregation (CSR row pointers via PrefetchScalarGridSpec + manual
# neighbor-row DMA); dense-but-bf16 kept here for compact, shape-static code.
# ---------------------------------------------------------------------------
def build_adjacency(edge_index, n_src, n_dst, nt_pad, ns_pad):
    src, dst = edge_index[0], edge_index[1]
    counts = jnp.zeros((nt_pad, ns_pad), jnp.float32).at[dst, src].add(1.0)
    deg = jnp.sum(counts, axis=1, keepdims=True)
    inv_deg = 1.0 / jnp.maximum(deg, 1.0)      # isolated targets aggregate to 0 (PyG mean)
    # small-integer edge multiplicities are exactly representable in bf16
    return counts.astype(jnp.bfloat16), inv_deg


# ---------------------------------------------------------------------------
# SAGE module: parameters + forward.
# ---------------------------------------------------------------------------
def init_sage_params(key, in_channels, hidden_channels, out_channels, num_layers):
    if num_layers == 1:
        dims = [(in_channels, out_channels)]
    else:
        dims = ([(in_channels, hidden_channels)]
                + [(hidden_channels, hidden_channels)] * (num_layers - 2)
                + [(hidden_channels, out_channels)])
    params = []
    for (din, dout) in dims:
        key, k1, k2 = jax.random.split(key, 3)
        scale = (6.0 / (din + dout)) ** 0.5   # glorot-uniform
        w_l = jax.random.uniform(k1, (din, dout), jnp.float32, -scale, scale)
        w_r = jax.random.uniform(k2, (din, dout), jnp.float32, -scale, scale)
        b_l = jnp.zeros((1, dout), jnp.float32)
        params.append((w_l, b_l, w_r))
    return params


def sage_forward(x, adjs, params, *, tm_max=256, tk_max=512):
    num_layers = len(params)
    for i, ((edge_index, size), (w_l, b_l, w_r)) in enumerate(zip(adjs, params)):
        n_src, n_dst = size
        din, dout = w_l.shape
        din_pad = _round_up(din, 128)
        dout_pad = _round_up(dout, 128)
        # Tile sizes: lane axes padded to 128, target axis to 8. Defaults (256, 512)
        # keep double-buffered bf16 tiles + weights + f32 accumulator well under
        # v7x's 64 MiB VMEM while amortizing the ~0.35us per-grid-step overhead.
        tm = min(tm_max, _round_up(n_dst, 8))
        tk = min(tk_max, _round_up(n_src, 128))
        nt_pad = _round_up(n_dst, tm)
        ns_pad = _round_up(max(n_src, nt_pad), tk)   # >= nt_pad so targets are a row prefix

        a01, inv_deg = build_adjacency(edge_index, n_src, n_dst, nt_pad, ns_pad)
        x_p = _fit(x, ns_pad, din_pad).astype(jnp.bfloat16)   # bf16 halves HBM traffic
        w_l_p = _fit(w_l, din_pad, dout_pad)
        w_r_p = _fit(w_r, din_pad, dout_pad)
        b_l_p = _fit(b_l, 1, dout_pad)

        last = (i == num_layers - 1)
        x = sage_layer(a01, inv_deg, x_p, w_l_p, b_l_p, w_r_p,
                       dout_valid=dout, apply_relu=not last,
                       apply_log_softmax=last, tm=tm, tk=tk)
    return x   # (nt_pad_last, dout_pad_last); caller slices valid rows / channels


# ---------------------------------------------------------------------------
# Pure-JAX reference (mirrors the kernel's bf16 feature / adjacency casts).
# ---------------------------------------------------------------------------
def sage_reference(x, adjs, params):
    hp = jax.lax.Precision.HIGHEST
    num_layers = len(params)
    x = x.astype(jnp.bfloat16).astype(jnp.float32)
    for i, ((edge_index, size), (w_l, b_l, w_r)) in enumerate(zip(adjs, params)):
        n_src, n_dst = size
        src, dst = edge_index[0], edge_index[1]
        a = jnp.zeros((n_dst, n_src), jnp.float32).at[dst, src].add(1.0)
        deg = jnp.maximum(jnp.sum(a, axis=1, keepdims=True), 1.0)
        x_t = x[:n_dst]
        agg = jnp.dot(a, x, precision=hp) / deg
        out = (jnp.dot(agg, w_l, precision=hp) + b_l
               + jnp.dot(x_t, w_r, precision=hp))
        if i != num_layers - 1:
            out = jnp.maximum(out, 0.0)
            x = out.astype(jnp.bfloat16).astype(jnp.float32)
        else:
            x = jax.nn.log_softmax(out, axis=-1)
    return x


# ---------------------------------------------------------------------------
# Driver with a small deterministic synthetic neighbor-sampled mini-batch.
# ---------------------------------------------------------------------------
if __name__ == "__main__":
    key = jax.random.PRNGKey(0)

    in_channels, hidden_channels, out_channels = 32, 32, 16
    num_layers = 3
    node_counts = [64, 32, 16, 8]   # n_src per hop; targets are a prefix of sources

    k_params, k_x, k_edges = jax.random.split(key, 3)
    params = init_sage_params(k_params, in_channels, hidden_channels,
                              out_channels, num_layers)

    x = jax.random.normal(k_x, (node_counts[0], in_channels), jnp.float32)

    adjs = []
    for i in range(num_layers):
        n_src, n_dst = node_counts[i], node_counts[i + 1]
        n_edges = 4 * n_dst
        k_edges, ks, kd = jax.random.split(k_edges, 3)
        src = jax.random.randint(ks, (n_edges,), 0, n_src, jnp.int32)
        dst = jax.random.randint(kd, (n_edges,), 0, n_dst, jnp.int32)
        edge_index = jnp.stack([src, dst], axis=0)
        adjs.append((edge_index, (n_src, n_dst)))

    out_padded = sage_forward(x, adjs, params)
    out_padded = jax.block_until_ready(out_padded)
    out = out_padded[:node_counts[-1], :out_channels]

    assert out.shape == (node_counts[-1], out_channels)
    # log_softmax rows should sum (in prob space) to ~1 over the valid lanes
    assert jnp.allclose(jnp.sum(jnp.exp(out), axis=-1), 1.0, atol=1e-4)
    # match the pure-JAX reference (same bf16 casts; generous tol for f32 matmul paths)
    ref = sage_reference(x, adjs, params)
    assert jnp.allclose(out, ref, rtol=5e-2, atol=5e-2), \
        float(jnp.max(jnp.abs(out - ref)))

    print("KERNEL_OK")
</pallas_src>

<mosaic_0001>
module attributes {stable_mosaic.version = 11 : i64} {
  func.func @_sage_layer_kernel(%arg0: i32, %arg1: i32, %arg2: memref<32x128xbf16, #tpu.memory_space<vmem>>, %arg3: memref<128x128xbf16, #tpu.memory_space<vmem>>, %arg4: memref<32x128xbf16, #tpu.memory_space<vmem>>, %arg5: memref<32x1xf32, #tpu.memory_space<vmem>>, %arg6: memref<128x128xf32, #tpu.memory_space<vmem>>, %arg7: memref<1x128xf32, #tpu.memory_space<vmem>>, %arg8: memref<128x128xf32, #tpu.memory_space<vmem>>, %arg9: memref<32x128xf32, #tpu.memory_space<vmem>>, %arg10: memref<32x128xf32, #tpu.memory_space<vmem>>) attributes {dimension_semantics = [#tpu.dimension_semantics<parallel>, #tpu.dimension_semantics<arbitrary>], iteration_bounds = array<i64: 1, 1>, scalar_prefetch = 0 : i64, scratch_operands = 1 : i64, tpu.core_type = #tpu.core_type<tc>, window_params = [{transform_indices = @transform_0, window_bounds = array<i64: 32, 128>}, {transform_indices = @transform_1, window_bounds = array<i64: 128, 128>}, {transform_indices = @transform_2, window_bounds = array<i64: 32, 128>}, {transform_indices = @transform_3, window_bounds = array<i64: 32, 1>}, {pipeline_mode = #tpu.pipeline_mode<synchronous>, transform_indices = @transform_4, window_bounds = array<i64: 128, 128>}, {pipeline_mode = #tpu.pipeline_mode<synchronous>, transform_indices = @transform_5, window_bounds = array<i64: 1, 128>}, {pipeline_mode = #tpu.pipeline_mode<synchronous>, transform_indices = @transform_6, window_bounds = array<i64: 128, 128>}, {transform_indices = @transform_7, window_bounds = array<i64: 32, 128>}]} {
    %c0_i32 = arith.constant 0 : i32
    %0 = arith.cmpi eq, %arg1, %c0_i32 : i32
    %1 = arith.extui %0 : i1 to i32
    %c0_i32_0 = arith.constant 0 : i32
    %2 = arith.cmpi ne, %1, %c0_i32_0 : i32
    scf.if %2 {
      %cst_10 = arith.constant 0.000000e+00 : f32
      %12 = vector.broadcast %cst_10 : f32 to vector<32x128xf32>
      %c0_11 = arith.constant 0 : index
      %c0_12 = arith.constant 0 : index
      %13 = vector.load %arg10[%c0_11, %c0_12] : memref<32x128xf32, #tpu.memory_space<vmem>>, vector<32x128xf32>
      tpu.vector_store %arg10[%c0_11, %c0_12], %12 {strides = array<i32>} : memref<32x128xf32, #tpu.memory_space<vmem>>, vector<32x128xf32>,
    } else {
    }
    %c0 = arith.constant 0 : index
    %c0_1 = arith.constant 0 : index
    %3 = vector.load %arg10[%c0, %c0_1] : memref<32x128xf32, #tpu.memory_space<vmem>>, vector<32x128xf32>
    %c0_2 = arith.constant 0 : index
    %c0_3 = arith.constant 0 : index
    %4 = vector.load %arg2[%c0_2, %c0_3] : memref<32x128xbf16, #tpu.memory_space<vmem>>, vector<32x128xbf16>
    %c0_4 = arith.constant 0 : index
    %c0_5 = arith.constant 0 : index
    %5 = vector.load %arg3[%c0_4, %c0_5] : memref<128x128xbf16, #tpu.memory_space<vmem>>, vector<128x128xbf16>
    %cst = arith.constant dense<0.000000e+00> : vector<32x128xf32>
    %6 = tpu.matmul %4, %5, %cst {dimension_numbers = #tpu.dot_dimension_numbers<[1], [0], [0], [1], [0, 0, 1, 1], [], []>} : vector<32x128xbf16>, vector<128x128xbf16>, vector<32x128xf32> -> vector<32x128xf32>
    %7 = arith.addf %3, %6 : vector<32x128xf32>
    %c0_6 = arith.constant 0 : index
    %c0_7 = arith.constant 0 : index
    %8 = vector.load %arg10[%c0_6, %c0_7] : memref<32x128xf32, #tpu.memory_space<vmem>>, vector<32x128xf32>
    tpu.vector_store %arg10[%c0_6, %c0_7], %7 {strides = array<i32>} : memref<32x128xf32, #tpu.memory_space<vmem>>, vector<32x128xf32>,
    %c0_i32_8 = arith.constant 0 : i32
    %9 = arith.cmpi eq, %arg1, %c0_i32_8 : i32
    %10 = arith.extui %9 : i1 to i32
    %c0_i32_9 = arith.constant 0 : i32
    %11 = arith.cmpi ne, %10, %c0_i32_9 : i32
    scf.if %11 {
      %c0_10 = arith.constant 0 : index
      %c0_11 = arith.constant 0 : index
      %12 = vector.load %arg10[%c0_10, %c0_11] : memref<32x128xf32, #tpu.memory_space<vmem>>, vector<32x128xf32>
      %c0_12 = arith.constant 0 : index
      %c0_13 = arith.constant 0 : index
      %13 = vector.load %arg5[%c0_12, %c0_13] : memref<32x1xf32, #tpu.memory_space<vmem>>, vector<32x1xf32>
      %14 = vector.broadcast %13 : vector<32x1xf32> to vector<32x128xf32>
      %15 = arith.mulf %12, %14 : vector<32x128xf32>
      %c0_14 = arith.constant 0 : index
      %c0_15 = arith.constant 0 : index
      %16 = vector.load %arg6[%c0_14, %c0_15] : memref<128x128xf32, #tpu.memory_space<vmem>>, vector<128x128xf32>
      %cst_16 = arith.constant dense<0.000000e+00> : vector<32x128xf32>
      %17 = tpu.matmul %15, %16, %cst_16 {dimension_numbers = #tpu.dot_dimension_numbers<[1], [0], [0], [1], [0, 0, 1, 1], [], []>} : vector<32x128xf32>, vector<128x128xf32>, vector<32x128xf32> -> vector<32x128xf32>
      %c0_17 = arith.constant 0 : index
      %c0_18 = arith.constant 0 : index
      %18 = vector.load %arg7[%c0_17, %c0_18] : memref<1x128xf32, #tpu.memory_space<vmem>>, vector<1x128xf32>
      %19 = vector.broadcast %18 : vector<1x128xf32> to vector<32x128xf32>
      %20 = arith.addf %17, %19 : vector<32x128xf32>
      %c0_19 = arith.constant 0 : index
      %c0_20 = arith.constant 0 : index
      %21 = vector.load %arg4[%c0_19, %c0_20] : memref<32x128xbf16, #tpu.memory_space<vmem>>, vector<32x128xbf16>
      %22 = arith.extf %21 : vector<32x128xbf16> to vector<32x128xf32>
      %c0_21 = arith.constant 0 : index
      %c0_22 = arith.constant 0 : index
      %23 = vector.load %arg8[%c0_21, %c0_22] : memref<128x128xf32, #tpu.memory_space<vmem>>, vector<128x128xf32>
      %cst_23 = arith.constant dense<0.000000e+00> : vector<32x128xf32>
      %24 = tpu.matmul %22, %23, %cst_23 {dimension_numbers = #tpu.dot_dimension_numbers<[1], [0], [0], [1], [0, 0, 1, 1], [], []>} : vector<32x128xf32>, vector<128x128xf32>, vector<32x128xf32> -> vector<32x128xf32>
      %25 = arith.addf %20, %24 : vector<32x128xf32>
      %cst_24 = arith.constant 0.000000e+00 : f32
      %26 = vector.broadcast %cst_24 : f32 to vector<32x128xf32>
      %27 = arith.maximumf %25, %26 : vector<32x128xf32>
      %c0_25 = arith.constant 0 : index
      %c0_26 = arith.constant 0 : index
      %28 = vector.load %arg9[%c0_25, %c0_26] : memref<32x128xf32, #tpu.memory_space<vmem>>, vector<32x128xf32>
      tpu.vector_store %arg9[%c0_25, %c0_26], %27 {strides = array<i32>} : memref<32x128xf32, #tpu.memory_space<vmem>>, vector<32x128xf32>,
    } else {
    }
    return
  }
  func.func @transform_0(%arg0: i32, %arg1: i32) -> (i32, i32) {
    %c0_i32 = arith.constant 0 : i32
    return %arg0, %arg1 : i32, i32
  }
  func.func @transform_1(%arg0: i32, %arg1: i32) -> (i32, i32) {
    %c0_i32 = arith.constant 0 : i32
    %c0_i32_0 = arith.constant 0 : i32
    return %arg1, %c0_i32 : i32, i32
  }
  func.func @transform_2(%arg0: i32, %arg1: i32) -> (i32, i32) {
    %c0_i32 = arith.constant 0 : i32
    %c0_i32_0 = arith.constant 0 : i32
    return %arg0, %c0_i32 : i32, i32
  }
  func.func @transform_3(%arg0: i32, %arg1: i32) -> (i32, i32) {
    %c0_i32 = arith.constant 0 : i32
    %c0_i32_0 = arith.constant 0 : i32
    return %arg0, %c0_i32 : i32, i32
  }
  func.func @transform_4(%arg0: i32, %arg1: i32) -> (i32, i32) {
    %c0_i32 = arith.constant 0 : i32
    %c0_i32_0 = arith.constant 0 : i32
    %c0_i32_1 = arith.constant 0 : i32
    return %c0_i32, %c0_i32_0 : i32, i32
  }
  func.func @transform_5(%arg0: i32, %arg1: i32) -> (i32, i32) {
    %c0_i32 = arith.constant 0 : i32
    %c0_i32_0 = arith.constant 0 : i32
    %c0_i32_1 = arith.constant 0 : i32
    return %c0_i32, %c0_i32_0 : i32, i32
  }
  func.func @transform_6(%arg0: i32, %arg1: i32) -> (i32, i32) {
    %c0_i32 = arith.constant 0 : i32
    %c0_i32_0 = arith.constant 0 : i32
    %c0_i32_1 = arith.constant 0 : i32
    return %c0_i32, %c0_i32_0 : i32, i32
  }
  func.func @transform_7(%arg0: i32, %arg1: i32) -> (i32, i32) {
    %c0_i32 = arith.constant 0 : i32
    %c0_i32_0 = arith.constant 0 : i32
    return %arg0, %c0_i32 : i32, i32
  }
}

</mosaic_0001>

<llo_original>
// kernel: tpu_custom_call.1
$region0: #{tpu_custom_call.1}
  #allocation0 [shape = 'u32[]', space=smem, size = 0x4, offset = 0x4, fixed_abs, tag = 'smem constant byte address 0x4 - core index']
  #allocation1 [shape = 'u32[144,128]{1,0:T(1,128)}', space=vmem, size = 0x12000, scoped, tag = 'internal scratch']
  #allocation2 [shape = 'f32[32,128]{1,0:T(8,128)}', space=vmem, size = 0x4000, scoped, tag = 'scratch operand']
  %s0 = inlined_call_operand.vmem [shape: bf16[32,128], index: 0, kind: input, shape index: {}]
  %s1 = inlined_call_operand.hbm [shape: bf16[128,128], index: 1, kind: input, shape index: {}]
  %s2 = inlined_call_operand.hbm [shape: bf16[128,128], index: 2, kind: input, shape index: {}]
  %s3 = inlined_call_operand.vmem [shape: f32[32,1], index: 3, kind: input, shape index: {}]
  %s4 = inlined_call_operand.hbm [shape: f32[128,128], index: 4, kind: input, shape index: {}]
  %s5 = inlined_call_operand.vmem [shape: f32[1,128], index: 5, kind: input, shape index: {}]
  %s6 = inlined_call_operand.hbm [shape: f32[128,128], index: 6, kind: input, shape index: {}]
  %s7 = inlined_call_operand.hbm [shape: f32[32,128], index: 7, kind: output, shape index: {}]
  %s8 = sld [smem:[#allocation0]]
  $region62: #{tpu_custom_call.1} parent=0
    _
  %s10 = ssub.s32 1, %s8
  %s11 = scalar_select 0, %s10, %s8
  $region1: #{tpu_custom_call.1} parent=0
    #allocation3 [shape = 'u8[32768]{0}', space=vmem, size = 0x8000, scoped, tag = 'input window, operand 1, single buffered']
    #allocation4 [shape = 's32[1]{0}', space=sflag, size = 0x4, scoped, tag = 'scoped memory for tpu_custom_call.1']
    #allocation5 [shape = 's32[1]{0}', space=sflag, size = 0x4, scoped, tag = 'scoped memory for tpu_custom_call.1']
    #allocation6 [shape = 'u8[8192]{0}', space=vmem, size = 0x2000, scoped, tag = 'input window, operand 2, single buffered']
    #allocation7 [shape = 's32[1]{0}', space=sflag, size = 0x4, scoped, tag = 'scoped memory for tpu_custom_call.1']
    #allocation8 [shape = 'u8[65536]{0}', space=vmem, size = 0x10000, scoped, tag = 'input window, operand 4, single buffered']
    #allocation9 [shape = 'u8[65536]{0}', space=vmem, size = 0x10000, scoped, tag = 'input window, operand 6, single buffered']
    #allocation10 [shape = 's32[1]{0}', space=sflag, size = 0x4, scoped, tag = 'scoped memory for tpu_custom_call.1']
    #allocation11 [shape = 'u8[16384]{0}', space=vmem, size = 0x4000, scoped, tag = 'output window, operand 0, single buffered']
    %12 = vsyncpa [#allocation4], 0
    %13 = vsyncpa [#allocation7], 0
    %14 = vsyncpa [#allocation10], 0
    %15 = vsyncpa [#allocation5], 0
    // Predicated region
    $region2: #{tpu_custom_call.1} parent=1 // pred_check
      _
    $region3: #{tpu_custom_call.1} parent=1 // pred_check_branch
      %17 = sbr.rel (0) target = $region5
    $region4: #{tpu_custom_call.1} parent=1 // pred_region
      _
    $region5: #{tpu_custom_call.1} parent=1 // pred_fallthru
      _
    // Predicated region
    $region6: #{tpu_custom_call.1} parent=1 // pred_check
      _
    $region7: #{tpu_custom_call.1} parent=1 // pred_check_branch
      %19 = sbr.rel (0) target = $region9
    $region8: #{tpu_custom_call.1} parent=1 // pred_region
      %s21 = ssub.s32 1024, 1024
      %22 = vsyncadd [#allocation4], %s21
      %s23 = sshll.u32 [#allocation3], 4
      %s24 = int_to_ptr.vmem [resolvable:$true] %s23
      %29 = dma.hbm_to_vmem [thread:$0]  %s1, 1024, %s24, [#allocation4], 64, 64, 4
    $region9: #{tpu_custom_call.1} parent=1 // pred_fallthru
      _
    // Predicated region
    $region10: #{tpu_custom_call.1} parent=1 // pred_check
      _
    $region11: #{tpu_custom_call.1} parent=1 // pred_check_branch
      %31 = sbr.rel (0) target = $region13
    $region12: #{tpu_custom_call.1} parent=1 // pred_region
      %s33 = ssub.s32 256, 256
      %34 = vsyncadd [#allocation7], %s33
      %s35 = sshll.u32 [#allocation6], 4
      %s36 = int_to_ptr.vmem [resolvable:$true] %s35
      %41 = dma.hbm_to_vmem [thread:$0]  %s2, 256, %s36, [#allocation7], 64, 64, 4
    $region13: #{tpu_custom_call.1} parent=1 // pred_fallthru
      _
    // Predicated region
    $region14: #{tpu_custom_call.1} parent=1 // pred_check
      _
    $region15: #{tpu_custom_call.1} parent=1 // pred_check_branch
      %43 = sbr.rel (0) target = $region17
    $region16: #{tpu_custom_call.1} parent=1 // pred_region
      _
    $region17: #{tpu_custom_call.1} parent=1 // pred_fallthru
      _
    // Predicated region
    $region18: #{tpu_custom_call.1} parent=1 // pred_check
      _
    $region19: #{tpu_custom_call.1} parent=1 // pred_check_branch
      %45 = sbr.rel (0) target = $region21
    $region20: #{tpu_custom_call.1} parent=1 // pred_region
      %s47 = ssub.s32 2048, 2048
      %48 = vsyncadd [#allocation7], %s47
      %s49 = sshll.u32 [#allocation8], 4
      %s50 = int_to_ptr.vmem [resolvable:$true] %s49
      %55 = dma.hbm_to_vmem [thread:$0]  %s4, 2048, %s50, [#allocation7], 128, 128, 8
    $region21: #{tpu_custom_call.1} parent=1 // pred_fallthru
      _
    // Predicated region
    $region22: #{tpu_custom_call.1} parent=1 // pred_check
      _
    $region23: #{tpu_custom_call.1} parent=1 // pred_check_branch
      %57 = sbr.rel (0) target = $region25
    $region24: #{tpu_custom_call.1} parent=1 // pred_region
      _
    $region25: #{tpu_custom_call.1} parent=1 // pred_fallthru
      _
    // Predicated region
    $region26: #{tpu_custom_call.1} parent=1 // pred_check
      _
    $region27: #{tpu_custom_call.1} parent=1 // pred_check_branch
      %59 = sbr.rel (0) target = $region29
    $region28: #{tpu_custom_call.1} parent=1 // pred_region
      %s61 = ssub.s32 2048, 2048
      %62 = vsyncadd [#allocation10], %s61
      %s63 = sshll.u32 [#allocation9], 4
      %s64 = int_to_ptr.vmem [resolvable:$true] %s63
      %69 = dma.hbm_to_vmem [thread:$0]  %s6, 2048, %s64, [#allocation10], 128, 128, 8
    $region29: #{tpu_custom_call.1} parent=1 // pred_fallthru
      _
    // Predicated region
    $region30: #{tpu_custom_call.1} parent=1 // pred_check
      _
    $region31: #{tpu_custom_call.1} parent=1 // pred_check_branch
      %71 = sbr.rel (0) target = $region33
    $region32: #{tpu_custom_call.1} parent=1 // pred_region
      %72 = dma.done [#allocation4], 1024
    $region33: #{tpu_custom_call.1} parent=1 // pred_fallthru
      _
    // Predicated region
    $region34: #{tpu_custom_call.1} parent=1 // pred_check
      _
    $region35: #{tpu_custom_call.1} parent=1 // pred_check_branch
      %74 = sbr.rel (0) target = $region37
    $region36: #{tpu_custom_call.1} parent=1 // pred_region
      %75 = dma.done [#allocation7], 256
    $region37: #{tpu_custom_call.1} parent=1 // pred_fallthru
      _
    // Predicated region
    $region38: #{tpu_custom_call.1} parent=1 // pred_check
      _
    $region39: #{tpu_custom_call.1} parent=1 // pred_check_branch
      %77 = sbr.rel (0) target = $region41
    $region40: #{tpu_custom_call.1} parent=1 // pred_region
      %78 = dma.done [#allocation7], 2048
    $region41: #{tpu_custom_call.1} parent=1 // pred_fallthru
      _
    // Predicated region
    $region42: #{tpu_custom_call.1} parent=1 // pred_check
      _
    $region43: #{tpu_custom_call.1} parent=1 // pred_check_branch
      %80 = sbr.rel (0) target = $region45
    $region44: #{tpu_custom_call.1} parent=1 // pred_region
      %81 = dma.done [#allocation10], 2048
    $region45: #{tpu_custom_call.1} parent=1 // pred_fallthru
      _
    %p83 = scmp.eq.s32.totalorder 0, 0
    // Predicated region
    $region46: #{tpu_custom_call.1} parent=1 // pred_check
      %p84 = pneg %p83
    $region47: #{tpu_custom_call.1} parent=1 // pred_check_branch
      %86 = sbr.rel (%p84) target = $region49
    $region48: #{tpu_custom_call.1} parent=1 // pred_region
      %87 = vst [vmem:[#allocation2] sm:$0xff] 0.0
      %88 = vst [vmem:[#allocation2 + $0x8] sm:$0xff] 0.0
      %89 = vst [vmem:[#allocation2 + $0x10] sm:$0xff] 0.0
      %90 = vst [vmem:[#allocation2 + $0x18] sm:$0xff] 0.0
    $region49: #{tpu_custom_call.1} parent=1 // pred_fallthru
      _
    %v91 = vld [vmem:[#allocation2] sm:$0xff]
    %v92 = vld [vmem:[#allocation2 + $0x8] sm:$0xff]
    %v93 = vld [vmem:[#allocation2 + $0x10] sm:$0xff]
    %v94 = vld [vmem:[#allocation2 + $0x18] sm:$0xff]
    %v95 = vld [vmem:[%s0] sm:$0xf]
    %v96 = vld [vmem:[%s0 + $0x4] sm:$0xf]
    %v97 = vld [vmem:[%s0 + $0x8] sm:$0xf]
    %v98 = vld [vmem:[%s0 + $0xc] sm:$0xf]
    %v99 = vld [vmem:[#allocation3] sm:$0xf]
    %v100 = vld [vmem:[#allocation3 + $0x4] sm:$0xf]
    %v101 = vld [vmem:[#allocation3 + $0x8] sm:$0xf]
    %v102 = vld [vmem:[#allocation3 + $0xc] sm:$0xf]
    %v103 = vld [vmem:[#allocation3 + $0x10] sm:$0xf]
    %v104 = vld [vmem:[#allocation3 + $0x14] sm:$0xf]
    %v105 = vld [vmem:[#allocation3 + $0x18] sm:$0xf]
    %v106 = vld [vmem:[#allocation3 + $0x1c] sm:$0xf]
    %v107 = vld [vmem:[#allocation3 + $0x20] sm:$0xf]
    %v108 = vld [vmem:[#allocation3 + $0x24] sm:$0xf]
    %v109 = vld [vmem:[#allocation3 + $0x28] sm:$0xf]
    %v110 = vld [vmem:[#allocation3 + $0x2c] sm:$0xf]
    %v111 = vld [vmem:[#allocation3 + $0x30] sm:$0xf]
    %v112 = vld [vmem:[#allocation3 + $0x34] sm:$0xf]
    %v113 = vld [vmem:[#allocation3 + $0x38] sm:$0xf]
    %v114 = vld [vmem:[#allocation3 + $0x3c] sm:$0xf]
    %v119 = vunpack.c.l.b16 %v95
    %v120 = vunpack.c.l.b16 %v96
    %v121 = vunpack.c.l.b16 %v97
    %v122 = vunpack.c.l.b16 %v98
    %v123 = vpack.c.b16 %v120, %v119
    %v124 = vpack.c.b16 %v122, %v121
    %v143 = vunpack.c.l.b16 %v99
    %v144 = vunpack.c.l.b16 %v100
    %v145 = vunpack.c.l.b16 %v101
    %v146 = vunpack.c.l.b16 %v102
    %v147 = vunpack.c.l.b16 %v103
    %v148 = vunpack.c.l.b16 %v104
    %v149 = vunpack.c.l.b16 %v105
    %v150 = vunpack.c.l.b16 %v106
    %v151 = vunpack.c.l.b16 %v107
    %v152 = vunpack.c.l.b16 %v108
    %v153 = vunpack.c.l.b16 %v109
    %v154 = vunpack.c.l.b16 %v110
    %v155 = vunpack.c.l.b16 %v111
    %v156 = vunpack.c.l.b16 %v112
    %v157 = vunpack.c.l.b16 %v113
    %v158 = vunpack.c.l.b16 %v114
    %v159 = vpack.c.b16 %v144, %v143
    %v160 = vpack.c.b16 %v146, %v145
    %v161 = vpack.c.b16 %v148, %v147
    %v162 = vpack.c.b16 %v150, %v149
    %v163 = vpack.c.b16 %v152, %v151
    %v164 = vpack.c.b16 %v154, %v153
    %v165 = vpack.c.b16 %v156, %v155
    %v166 = vpack.c.b16 %v158, %v157
    %175 = vmatprep.subr.bf16.mxu0 0
    %176 = vmatpush1.bf16.msra.mxu0 %v166
    %177 = vmatprep.subr.bf16.mxu0 0
    %178 = vmatpush1.bf16.msra.mxu0 %v165
    %179 = vmatprep.subr.bf16.mxu0 0
    %180 = vmatpush1.bf16.msra.mxu0 %v164
    %181 = vmatprep.subr.bf16.mxu0 0
    %182 = vmatpush1.bf16.msra.mxu0 %v163
    %183 = vmatprep.subr.bf16.mxu0 0
    %184 = vmatpush1.bf16.msra.mxu0 %v162
    %185 = vmatprep.subr.bf16.mxu0 0
    %186 = vmatpush1.bf16.msra.mxu0 %v161
    %187 = vmatprep.subr.bf16.mxu0 0
    %188 = vmatpush1.bf16.msra.mxu0 %v160
    %189 = vmatprep.subr.bf16.mxu0 0
    %190 = vmatpush1.bf16.msra.mxu0 %v159
    %191 = vmatprep.subr.bf16.mxu0 0
    %192 = vmatpush2.bf16.msra.mxu0 0
    %193 = vmatprep.subr.bf16.mxu0 0
    %194 = vmatpush2.bf16.msra.mxu0 0
    %195 = vmatprep.subr.bf16.mxu0 0
    %196 = vmatpush2.bf16.msra.mxu0 0
    %197 = vmatprep.subr.bf16.mxu0 0
    %198 = vmatpush2.bf16.msra.mxu0 0
    %199 = vmatprep.subr.bf16.mxu0 0
    %200 = vmatpush2.bf16.msra.mxu0 0
    %201 = vmatprep.subr.bf16.mxu0 0
    %202 = vmatpush2.bf16.msra.mxu0 0
    %203 = vmatprep.subr.bf16.mxu0 0
    %204 = vmatpush2.bf16.msra.mxu0 0
    %205 = vmatprep.subr.bf16.mxu0 0
    %206 = vmatpush2.bf16.msra.mxu0 0
    %207 = vmatprep.mubr.bf16.mxu0 0
    %208 = vmatmul.mubr.bf16.gmra.mxu0 %v123
    %v209 = vpop.f32.mrf.mxu0
    %v210 = vadd.f32 0.0, %v209
    %v211 = vpop.f32.mrf.mxu0
    %v212 = vpop.f32.mrf.mxu0
    %v213 = vadd.f32 0.0, %v212
    %v214 = vpop.f32.mrf.mxu0
    %215 = vmatprep.mubr.bf16.mxu0 0
    %216 = vmatmul.mubr.bf16.gmra.mxu0 %v124
    %v217 = vpop.f32.mrf.mxu0
    %v218 = vadd.f32 0.0, %v217
    %v219 = vpop.f32.mrf.mxu0
    %v220 = vpop.f32.mrf.mxu0
    %v221 = vadd.f32 0.0, %v220
    %v222 = vpop.f32.mrf.mxu0
    %223 = vdwg.mxu0
    %v224 = vadd.f32 %v91, %v210
    %v225 = vadd.f32 %v92, %v213
    %v226 = vadd.f32 %v93, %v218
    %v227 = vadd.f32 %v94, %v221
    %228 = vst [vmem:[#allocation2] sm:$0xff] %v224
    %229 = vst [vmem:[#allocation2 + $0x8] sm:$0xff] %v225
    %230 = vst [vmem:[#allocation2 + $0x10] sm:$0xff] %v226
    %231 = vst [vmem:[#allocation2 + $0x18] sm:$0xff] %v227
    // Predicated region
    $region50: #{tpu_custom_call.1} parent=1 // pred_check
      %p232 = pneg %p83
    $region51: #{tpu_custom_call.1} parent=1 // pred_check_branch
      %234 = sbr.rel (%p232) target = $region53
    $region52: #{tpu_custom_call.1} parent=1 // pred_region
      %v235 = vld [vmem:[#allocation2] sm:$0xff]
      %v236 = vld [vmem:[#allocation2 + $0x8] sm:$0xff]
      %v237 = vld [vmem:[#allocation2 + $0x10] sm:$0xff]
      %v238 = vld [vmem:[#allocation2 + $0x18] sm:$0xff]
      %v239 = vld [vmem:[%s3] sm:$0xff]
      %v240 = vld [vmem:[%s3 + $0x8] sm:$0xff]
      %v241 = vld [vmem:[%s3 + $0x10] sm:$0xff]
      %v242 = vld [vmem:[%s3 + $0x18] sm:$0xff]
      %244 = vset.pattern.permute.xlu0 0
      %245 = vperm.xlu0 %244, %v239
      %v246 = vpop.permute.xlu0 %245
      %249 = vset.pattern.permute.xlu0 0
      %250 = vperm.xlu0 %249, %v240
      %v251 = vpop.permute.xlu0 %250
      %254 = vset.pattern.permute.xlu0 0
      %255 = vperm.xlu0 %254, %v241
      %v256 = vpop.permute.xlu0 %255
      %259 = vset.pattern.permute.xlu0 0
      %260 = vperm.xlu0 %259, %v242
      %v261 = vpop.permute.xlu0 %260
      %v263 = vmul.f32 %v235, %v246
      %v264 = vmul.f32 %v236, %v251
      %v265 = vmul.f32 %v237, %v256
      %v266 = vmul.f32 %v238, %v261
      %v267 = vld [vmem:[#allocation8] sm:$0xff]
      %v268 = vld [vmem:[#allocation8 + $0x8] sm:$0xff]
      %v269 = vld [vmem:[#allocation8 + $0x10] sm:$0xff]
      %v270 = vld [vmem:[#allocation8 + $0x18] sm:$0xff]
      %v271 = vld [vmem:[#allocation8 + $0x20] sm:$0xff]
      %v272 = vld [vmem:[#allocation8 + $0x28] sm:$0xff]
      %v273 = vld [vmem:[#allocation8 + $0x30] sm:$0xff]
      %v274 = vld [vmem:[#allocation8 + $0x38] sm:$0xff]
      %v275 = vld [vmem:[#allocation8 + $0x40] sm:$0xff]
      %v276 = vld [vmem:[#allocation8 + $0x48] sm:$0xff]
      %v277 = vld [vmem:[#allocation8 + $0x50] sm:$0xff]
      %v278 = vld [vmem:[#allocation8 + $0x58] sm:$0xff]
      %v279 = vld [vmem:[#allocation8 + $0x60] sm:$0xff]
      %v280 = vld [vmem:[#allocation8 + $0x68] sm:$0xff]
      %v281 = vld [vmem:[#allocation8 + $0x70] sm:$0xff]
      %v282 = vld [vmem:[#allocation8 + $0x78] sm:$0xff]
      %v283 = vld [vmem:[%s5] sm:$0x1]
      %v285 = vlaneseq
      %v286 = vshrl.u32 %v285, 7
      %v287 = vsub.s32 0, %v286
      %v288 = vrot.slane %v283, %v287
      %290 = vmatprep.subr.mxu0 0.0
      %291 = vmatpush1.msra.mxu0 %v282
      %292 = vmatprep.subr.mxu0 0.0
      %293 = vmatpush1.msra.mxu0 %v281
      %294 = vmatprep.subr.mxu0 0.0
      %295 = vmatpush1.msra.mxu0 %v280
      %296 = vmatprep.subr.mxu0 0.0
      %297 = vmatpush1.msra.mxu0 %v279
      %298 = vmatprep.subr.mxu0 0.0
      %299 = vmatpush1.msra.mxu0 %v278
      %300 = vmatprep.subr.mxu0 0.0
      %301 = vmatpush1.msra.mxu0 %v277
      %302 = vmatprep.subr.mxu0 0.0
      %303 = vmatpush1.msra.mxu0 %v276
      %304 = vmatprep.subr.mxu0 0.0
      %305 = vmatpush1.msra.mxu0 %v275
      %306 = vmatprep.subr.mxu0 0.0
      %307 = vmatpush1.msra.mxu0 %v274
      %308 = vmatprep.subr.mxu0 0.0
      %309 = vmatpush1.msra.mxu0 %v273
      %310 = vmatprep.subr.mxu0 0.0
      %311 = vmatpush1.msra.mxu0 %v272
      %312 = vmatprep.subr.mxu0 0.0
      %313 = vmatpush1.msra.mxu0 %v271
      %314 = vmatprep.subr.mxu0 0.0
      %315 = vmatpush1.msra.mxu0 %v270
      %316 = vmatprep.subr.mxu0 0.0
      %317 = vmatpush1.msra.mxu0 %v269
      %318 = vmatprep.subr.mxu0 0.0
      %319 = vmatpush1.msra.mxu0 %v268
      %320 = vmatprep.subr.mxu0 0.0
      %321 = vmatpush1.msra.mxu0 %v267
      %322 = vmatprep.subr.mxu0 0.0
      %323 = vmatpush2.msra.mxu0 0.0
      %324 = vmatprep.subr.mxu0 0.0
      %325 = vmatpush2.msra.mxu0 0.0
      %326 = vmatprep.subr.mxu0 0.0
      %327 = vmatpush2.msra.mxu0 0.0
      %328 = vmatprep.subr.mxu0 0.0
      %329 = vmatpush2.msra.mxu0 0.0
      %330 = vmatprep.subr.mxu0 0.0
      %331 = vmatpush2.msra.mxu0 0.0
      %332 = vmatprep.subr.mxu0 0.0
      %333 = vmatpush2.msra.mxu0 0.0
      %334 = vmatprep.subr.mxu0 0.0
      %335 = vmatpush2.msra.mxu0 0.0
      %336 = vmatprep.subr.mxu0 0.0
      %337 = vmatpush2.msra.mxu0 0.0
      %338 = vmatprep.subr.mxu0 0.0
      %339 = vmatpush2.msra.mxu0 0.0
      %340 = vmatprep.subr.mxu0 0.0
      %341 = vmatpush2.msra.mxu0 0.0
      %342 = vmatprep.subr.mxu0 0.0
      %343 = vmatpush2.msra.mxu0 0.0
      %344 = vmatprep.subr.mxu0 0.0
      %345 = vmatpush2.msra.mxu0 0.0
      %346 = vmatprep.subr.mxu0 0.0
      %347 = vmatpush2.msra.mxu0 0.0
      %348 = vmatprep.subr.mxu0 0.0
      %349 = vmatpush2.msra.mxu0 0.0
      %350 = vmatprep.subr.mxu0 0.0
      %351 = vmatpush2.msra.mxu0 0.0
      %352 = vmatprep.subr.mxu0 0.0
      %353 = vmatpush2.msra.mxu0 0.0
      %354 = vmatprep.mubr.f32.mxu0 0.0
      %355 = vmatmul.mubr.f32.gmra.mxu0 %v263
      %v356 = vpop.f32.mrf.mxu0
      %v357 = vadd.f32 %v288, %v356
      %v358 = vpop.f32.mrf.mxu0
      %359 = vmatprep.mubr.f32.mxu0 0.0
      %360 = vmatmul.mubr.f32.gmra.mxu0 %v264
      %v361 = vpop.f32.mrf.mxu0
      %v362 = vadd.f32 %v288, %v361
      %v363 = vpop.f32.mrf.mxu0
      %364 = vmatprep.mubr.f32.mxu0 0.0
      %365 = vmatmul.mubr.f32.gmra.mxu0 %v265
      %v366 = vpop.f32.mrf.mxu0
      %v367 = vadd.f32 %v288, %v366
      %v368 = vpop.f32.mrf.mxu0
      %369 = vmatprep.mubr.f32.mxu0 0.0
      %370 = vmatmul.mubr.f32.gmra.mxu0 %v266
      %v371 = vpop.f32.mrf.mxu0
      %v372 = vadd.f32 %v288, %v371
      %v373 = vpop.f32.mrf.mxu0
      %374 = vdwg.mxu0
      %v375 = vld [vmem:[#allocation6] sm:$0xf]
      %v376 = vld [vmem:[#allocation6 + $0x4] sm:$0xf]
      %v377 = vld [vmem:[#allocation6 + $0x8] sm:$0xf]
      %v378 = vld [vmem:[#allocation6 + $0xc] sm:$0xf]
      %v379 = vunpack.c.l.bf16 %v375
      %v380 = vunpack.c.l.bf16 %v376
      %v381 = vunpack.c.l.bf16 %v377
      %v382 = vunpack.c.l.bf16 %v378
      %v383 = vld [vmem:[#allocation9] sm:$0xff]
      %v384 = vld [vmem:[#allocation9 + $0x8] sm:$0xff]
      %v385 = vld [vmem:[#allocation9 + $0x10] sm:$0xff]
      %v386 = vld [vmem:[#allocation9 + $0x18] sm:$0xff]
      %v387 = vld [vmem:[#allocation9 + $0x20] sm:$0xff]
      %v388 = vld [vmem:[#allocation9 + $0x28] sm:$0xff]
      %v389 = vld [vmem:[#allocation9 + $0x30] sm:$0xff]
      %v390 = vld [vmem:[#allocation9 + $0x38] sm:$0xff]
      %v391 = vld [vmem:[#allocation9 + $0x40] sm:$0xff]
      %v392 = vld [vmem:[#allocation9 + $0x48] sm:$0xff]
      %v393 = vld [vmem:[#allocation9 + $0x50] sm:$0xff]
      %v394 = vld [vmem:[#allocation9 + $0x58] sm:$0xff]
      %v395 = vld [vmem:[#allocation9 + $0x60] sm:$0xff]
      %v396 = vld [vmem:[#allocation9 + $0x68] sm:$0xff]
      %v397 = vld [vmem:[#allocation9 + $0x70] sm:$0xff]
      %v398 = vld [vmem:[#allocation9 + $0x78] sm:$0xff]
      %399 = vmatprep.subr.mxu0 0.0
      %400 = vmatpush1.msra.mxu0 %v398
      %401 = vmatprep.subr.mxu0 0.0
      %402 = vmatpush1.msra.mxu0 %v397
      %403 = vmatprep.subr.mxu0 0.0
      %404 = vmatpush1.msra.mxu0 %v396
      %405 = vmatprep.subr.mxu0 0.0
      %406 = vmatpush1.msra.mxu0 %v395
      %407 = vmatprep.subr.mxu0 0.0
      %408 = vmatpush1.msra.mxu0 %v394
      %409 = vmatprep.subr.mxu0 0.0
      %410 = vmatpush1.msra.mxu0 %v393
      %411 = vmatprep.subr.mxu0 0.0
      %412 = vmatpush1.msra.mxu0 %v392
      %413 = vmatprep.subr.mxu0 0.0
      %414 = vmatpush1.msra.mxu0 %v391
      %415 = vmatprep.subr.mxu0 0.0
      %416 = vmatpush1.msra.mxu0 %v390
      %417 = vmatprep.subr.mxu0 0.0
      %418 = vmatpush1.msra.mxu0 %v389
      %419 = vmatprep.subr.mxu0 0.0
      %420 = vmatpush1.msra.mxu0 %v388
      %421 = vmatprep.subr.mxu0 0.0
      %422 = vmatpush1.msra.mxu0 %v387
      %423 = vmatprep.subr.mxu0 0.0
      %424 = vmatpush1.msra.mxu0 %v386
      %425 = vmatprep.subr.mxu0 0.0
      %426 = vmatpush1.msra.mxu0 %v385
      %427 = vmatprep.subr.mxu0 0.0
      %428 = vmatpush1.msra.mxu0 %v384
      %429 = vmatprep.subr.mxu0 0.0
      %430 = vmatpush1.msra.mxu0 %v383
      %431 = vmatprep.subr.mxu0 0.0
      %432 = vmatpush2.msra.mxu0 0.0
      %433 = vmatprep.subr.mxu0 0.0
      %434 = vmatpush2.msra.mxu0 0.0
      %435 = vmatprep.subr.mxu0 0.0
      %436 = vmatpush2.msra.mxu0 0.0
      %437 = vmatprep.subr.mxu0 0.0
      %438 = vmatpush2.msra.mxu0 0.0
      %439 = vmatprep.subr.mxu0 0.0
      %440 = vmatpush2.msra.mxu0 0.0
      %441 = vmatprep.subr.mxu0 0.0
      %442 = vmatpush2.msra.mxu0 0.0
      %443 = vmatprep.subr.mxu0 0.0
      %444 = vmatpush2.msra.mxu0 0.0
      %445 = vmatprep.subr.mxu0 0.0
      %446 = vmatpush2.msra.mxu0 0.0
      %447 = vmatprep.subr.mxu0 0.0
      %448 = vmatpush2.msra.mxu0 0.0
      %449 = vmatprep.subr.mxu0 0.0
      %450 = vmatpush2.msra.mxu0 0.0
      %451 = vmatprep.subr.mxu0 0.0
      %452 = vmatpush2.msra.mxu0 0.0
      %453 = vmatprep.subr.mxu0 0.0
      %454 = vmatpush2.msra.mxu0 0.0
      %455 = vmatprep.subr.mxu0 0.0
      %456 = vmatpush2.msra.mxu0 0.0
      %457 = vmatprep.subr.mxu0 0.0
      %458 = vmatpush2.msra.mxu0 0.0
      %459 = vmatprep.subr.mxu0 0.0
      %460 = vmatpush2.msra.mxu0 0.0
      %461 = vmatprep.subr.mxu0 0.0
      %462 = vmatpush2.msra.mxu0 0.0
      %463 = vmatprep.mubr.f32.mxu0 0.0
      %464 = vmatmul.mubr.f32.gmra.mxu0 %v379
      %v465 = vpop.f32.mrf.mxu0
      %v466 = vadd.f32 0.0, %v465
      %v467 = vpop.f32.mrf.mxu0
      %468 = vmatprep.mubr.f32.mxu0 0.0
      %469 = vmatmul.mubr.f32.gmra.mxu0 %v380
      %v470 = vpop.f32.mrf.mxu0
      %v471 = vadd.f32 0.0, %v470
      %v472 = vpop.f32.mrf.mxu0
      %473 = vmatprep.mubr.f32.mxu0 0.0
      %474 = vmatmul.mubr.f32.gmra.mxu0 %v381
      %v475 = vpop.f32.mrf.mxu0
      %v476 = vadd.f32 0.0, %v475
      %v477 = vpop.f32.mrf.mxu0
      %478 = vmatprep.mubr.f32.mxu0 0.0
      %479 = vmatmul.mubr.f32.gmra.mxu0 %v382
      %v480 = vpop.f32.mrf.mxu0
      %v481 = vadd.f32 0.0, %v480
      %v482 = vpop.f32.mrf.mxu0
      %483 = vdwg.mxu0
      %v484 = vadd.f32 %v357, %v466
      %v485 = vadd.f32 %v362, %v471
      %v486 = vadd.f32 %v367, %v476
      %v487 = vadd.f32 %v372, %v481
      %v488 = vmax.f32 %v484, 0.0
      %v489 = vmax.f32 %v485, 0.0
      %v490 = vmax.f32 %v486, 0.0
      %v491 = vmax.f32 %v487, 0.0
      %492 = vst [vmem:[#allocation11] sm:$0xff] %v488
      %493 = vst [vmem:[#allocation11 + $0x8] sm:$0xff] %v489
      %494 = vst [vmem:[#allocation11 + $0x10] sm:$0xff] %v490
      %495 = vst [vmem:[#allocation11 + $0x18] sm:$0xff] %v491
    $region53: #{tpu_custom_call.1} parent=1 // pred_fallthru
      _
    // Predicated region
    $region54: #{tpu_custom_call.1} parent=1 // pred_check
      _
    $region55: #{tpu_custom_call.1} parent=1 // pred_check_branch
      %497 = sbr.rel (0) target = $region57
    $region56: #{tpu_custom_call.1} parent=1 // pred_region
      %s499 = ssub.s32 512, 512
      %500 = vsyncadd [#allocation5], %s499
      %s501 = sshll.u32 [#allocation11], 4
      %s502 = int_to_ptr.vmem [resolvable:$true] %s501
      %507 = dma.vmem_to_hbm [thread:$0]  %s502, 512, %s7, [#allocation5], 128, 128, 8
    $region57: #{tpu_custom_call.1} parent=1 // pred_fallthru
      _
    // Predicated region
    $region58: #{tpu_custom_call.1} parent=1 // pred_check
      _
    $region59: #{tpu_custom_call.1} parent=1 // pred_check_branch
      %509 = sbr.rel (0) target = $region61
    $region60: #{tpu_custom_call.1} parent=1 // pred_region
      %510 = dma.done [#allocation5], 512
    $region61: #{tpu_custom_call.1} parent=1 // pred_fallthru
      _
    %511 = vsyncpa [#allocation4], 1
    %512 = vsyncpa [#allocation7], 1
    %513 = vsyncpa [#allocation10], 1
    %514 = vsyncpa [#allocation5], 1

</llo_original>
